<compile_context>
chip_gen: v7x
topology: tpu7x:2x2x1
jax: 0.10.0
libtpu: 0.0.40
codegen_flags: <defaults>
</compile_context>

<pallas_src>
import functools

import jax
import jax.numpy as jnp
from jax import lax
from jax.experimental import pallas as pl
from jax.experimental.pallas import tpu as pltpu


_MIN_GRID_STEPS = 8                        # keep the DMA pipeline / megacore fed
_FALLBACK_VMEM_BYTES = 64 * 1024 * 1024    # conservative (v7x per-core VMEM)


def _vmem_capacity_bytes():
    """Physical VMEM per core, with a conservative fallback."""
    try:
        cap = int(pltpu.get_tpu_info().vmem_capacity_bytes)
        if cap > 0:
            return cap
    except Exception:
        pass
    return _FALLBACK_VMEM_BYTES


def _exact_parts(x, num_parts=3):
    """Split a float array into bf16 parts whose (f32) sum reconstructs ~x.

    A {0,1} one-hot matmul over these parts is exact at MXU/bf16 precision;
    bf16 inputs need a single part, f32 needs three (8 mantissa bits each).
    """
    if x.dtype == jnp.bfloat16:
        return [x]
    r = x.astype(jnp.float32)
    parts = []
    for i in range(num_parts):
        p = r.astype(jnp.bfloat16)
        parts.append(p)
        if i + 1 < num_parts:
            r = r - p.astype(jnp.float32)
    return parts


def _fused_pool_kernel(x_ref, o_ref, *scratch, k, wp):
    """Fused 3-D max pool for kernel_size == stride == k, whole block at once.

    x_ref: (bn, k, ho, k*wp) block; lane index p = kh*wp + (w_out*k + kw).
    o_ref: (bn, ho, wo) block.
    scratch: optional (bn, ho8, wc) VMEM buffer, allocated only when ho % 8 != 0,
             used to sublane-align the row dim before the compaction matmul.
    """
    bn, ho, wo = o_ref.shape
    wc = wp - k + 1

    # Depth pooling: running max over kd (leading block dim, batched VPU max).
    y = x_ref[:, 0]
    for kd in range(1, k):
        y = jnp.maximum(y, x_ref[:, kd])                     # (bn, ho, k*wp)

    # Height pooling: the kh slabs are contiguous lane chunks of width wp.
    h = y[:, :, 0:wp]
    for kh in range(1, k):
        h = jnp.maximum(h, y[:, :, kh * wp:(kh + 1) * wp])   # (bn, ho, wp)

    # Width pooling (part 1): max over kw of shifted contiguous lane slices.
    m = h[:, :, 0:wc]
    for kw in range(1, k):
        m = jnp.maximum(m, h[:, :, kw:kw + wc])              # (bn, ho, wc)

    # Sublane-align the row dim so collapsing (bn, ho8, wc) -> (bn*ho8, wc) is a
    # layout-preserving (free) reshape.  The pad rows are never zeroed: they
    # only feed output rows that are sliced away below.
    if scratch:
        pad_ref = scratch[0]                                 # (bn, ho8, wc)
        pad_ref[:, 0:ho, :] = m
        m = pad_ref[...]
    ho8 = m.shape[1]
    rows = bn * ho8
    m2 = m.reshape(rows, wc)

    # Width pooling (part 2): exact lane compaction w_out*k -> w_out for the
    # whole block with a single one-hot matmul on the MXU.  f32 inputs: 3 bf16
    # parts stacked along the 8-aligned sublane dim, partial products re-summed
    # in f32 (same arithmetic as a 3-pass bf16 f32 matmul).
    parts = _exact_parts(m2)
    lhs = parts[0] if len(parts) == 1 else jnp.concatenate(parts, axis=0)

    w_ids = lax.broadcasted_iota(jnp.int32, (wc, wo), 0)
    wo_ids = lax.broadcasted_iota(jnp.int32, (wc, wo), 1)
    sel = (w_ids == wo_ids * k).astype(jnp.bfloat16)         # one-hot (wc, wo)

    d = jnp.dot(lhs, sel, preferred_element_type=jnp.float32)
    res = d[0:rows]
    for p in range(1, len(parts)):
        res = res + d[p * rows:(p + 1) * rows]               # (rows, wo) f32

    out = res.reshape(bn, ho8, wo)[:, 0:ho, :]
    o_ref[...] = out.astype(o_ref.dtype)


def _pool3d_fused(xp, k, n, c, do, ho, wo, wp):
    """kernel_size == stride path: window extraction fully inside the kernel."""
    dtype = xp.dtype
    ncd = n * c * do
    lane = k * wp
    # Free row-major reshape: (N, C, Do*k, Ho*k, Wp) -> (N*C*Do, k, Ho, k*Wp).
    xr = xp.reshape(ncd, k, ho, lane)

    cap = _vmem_capacity_bytes()
    # Per-input-block target sized off VMEM: 2x in + 2x out double buffers plus
    # in-kernel temporaries stay well under the scoped limit on every gen.
    block_target = max(1 << 20, cap // 10)
    row_bytes = k * ho * lane * dtype.itemsize
    bn = int(max(1, min(block_target // max(row_bytes, 1),
                        max(1, ncd // _MIN_GRID_STEPS),
                        ncd)))
    grid = (pl.cdiv(ncd, bn),)

    wc = wp - k + 1
    ho8 = -(-ho // 8) * 8
    scratch_shapes = []
    if ho8 != ho:
        scratch_shapes.append(pltpu.VMEM((bn, ho8, wc), dtype))

    nparts = 1 if dtype == jnp.bfloat16 else 3
    in_bytes = ncd * k * ho * lane * dtype.itemsize
    out_bytes = ncd * ho * wo * dtype.itemsize
    cost = pl.CostEstimate(
        flops=ncd * ho * (k - 1) * (k * wp + wp + wc)
        + 2 * nparts * ncd * ho8 * wc * wo,
        transcendentals=0,
        bytes_accessed=in_bytes + out_bytes,
    )

    out = pl.pallas_call(
        functools.partial(_fused_pool_kernel, k=k, wp=wp),
        out_shape=jax.ShapeDtypeStruct((ncd, ho, wo), dtype),
        grid=grid,
        in_specs=[pl.BlockSpec((bn, k, ho, lane), lambda i: (i, 0, 0, 0))],
        out_specs=pl.BlockSpec((bn, ho, wo), lambda i: (i, 0, 0)),
        scratch_shapes=tuple(scratch_shapes),
        compiler_params=pltpu.CompilerParams(
            dimension_semantics=("parallel",),
            vmem_limit_bytes=int(cap * 0.7),
        ),
        cost_estimate=cost,
    )(xr)
    return out.reshape(n, c, do, ho, wo)


def _general_max_kernel(w_ref, o_ref):
    # Single batched reduction across the k^3 window slabs (sublane dim).
    o_ref[...] = jnp.max(w_ref[...], axis=0, keepdims=True)


def _pool3d_general(xp, k, s, n, c, do, ho, wo):
    # TODO(synk): fuse the k != s window extraction into the kernel as well
    # (needs strided in-kernel loads); the slabs are gathered by XLA here,
    # which costs ~k^3 x the minimal HBM traffic.
    dtype = xp.dtype
    total = n * c * do * ho * wo
    slabs = []
    for kd in range(k):
        for kh in range(k):
            for kw in range(k):
                slabs.append(
                    lax.slice(
                        xp,
                        (0, 0, kd, kh, kw),
                        (n, c, kd + s * (do - 1) + 1, kh + s * (ho - 1) + 1,
                         kw + s * (wo - 1) + 1),
                        (1, 1, s, s, s),
                    ).reshape(1, total)
                )
    win = jnp.concatenate(slabs, axis=0)          # (k^3, total), lane-dense

    cap = _vmem_capacity_bytes()
    t = total if total <= 512 * 128 else 512 * 128
    grid = (pl.cdiv(total, t),)
    out = pl.pallas_call(
        _general_max_kernel,
        out_shape=jax.ShapeDtypeStruct((1, total), dtype),
        grid=grid,
        in_specs=[pl.BlockSpec((k ** 3, t), lambda i: (0, i))],
        out_specs=pl.BlockSpec((1, t), lambda i: (0, i)),
        compiler_params=pltpu.CompilerParams(
            dimension_semantics=("parallel",),
            vmem_limit_bytes=int(cap * 0.7),
        ),
    )(win)
    return out.reshape(n, c, do, ho, wo)


def pad_max_pool3d(f_maps, kernel_size, stride, return_indices=False,
                   return_pad=False):
    """JAX/Pallas equivalent of PadMaxPool3d.forward (NCDHW layout)."""
    if return_indices:
        # TODO(synk): PyTorch-style flat argmax indices are not implemented.
        raise NotImplementedError("return_indices=True is not supported")

    n, c, d, h, w = f_maps.shape
    k, s = int(kernel_size), int(stride)

    # Front-padding so every spatial dim becomes a multiple of the stride.
    pads = [(s - dim % s) % s for dim in (d, h, w)]
    pad_tuple = (pads[2], 0, pads[1], 0, pads[0], 0)

    if k == 1 and s == 1:
        return (f_maps, pad_tuple) if return_pad else f_maps

    xp = f_maps
    if any(pads):
        # TODO(synk): this materializes the padded volume in HBM (one extra
        # read+write); it could be folded into the kernel's input DMA.
        xp = jnp.pad(
            f_maps,
            ((0, 0), (0, 0), (pads[0], 0), (pads[1], 0), (pads[2], 0)),
            mode="constant", constant_values=0,
        )
    dp, hp, wp = d + pads[0], h + pads[1], w + pads[2]
    do = (dp - k) // s + 1
    ho = (hp - k) // s + 1
    wo = (wp - k) // s + 1

    if k == s and jnp.issubdtype(f_maps.dtype, jnp.floating):
        out = _pool3d_fused(xp, k, n, c, do, ho, wo, wp)
    else:
        out = _pool3d_general(xp, k, s, n, c, do, ho, wo)

    if return_pad:
        return out, pad_tuple
    return out


if __name__ == "__main__":
    def reference(v, k, s):
        pads = [(s - dim % s) % s for dim in v.shape[2:]]
        vp = jnp.pad(
            v, ((0, 0), (0, 0), (pads[0], 0), (pads[1], 0), (pads[2], 0)),
            constant_values=0)
        return lax.reduce_window(vp.astype(jnp.float32), -jnp.inf, lax.max,
                                 (1, 1, k, k, k), (1, 1, s, s, s), "VALID")

    key = jax.random.PRNGKey(0)
    k1, k2, k3, k4 = jax.random.split(key, 4)

    # Case 1: every spatial dim NOT a multiple of the stride -> padding path,
    # ho % 8 != 0 -> sublane-align scratch path, f32 3-part compaction.
    x1 = jax.random.normal(k1, (2, 4, 7, 9, 11), dtype=jnp.float32)
    out1 = jax.block_until_ready(pad_max_pool3d(x1, 2, 2))
    ref1 = reference(x1, 2, 2)
    assert out1.shape == ref1.shape and out1.dtype == x1.dtype
    assert jnp.allclose(out1, ref1), "mismatch (padded, f32)"

    # Case 2: already-aligned dims, tiny ncd -> bn == 1 blocks.
    x2 = jax.random.normal(k2, (1, 5, 6, 8, 12), dtype=jnp.float32)
    out2 = jax.block_until_ready(pad_max_pool3d(x2, 2, 2))
    ref2 = reference(x2, 2, 2)
    assert out2.shape == ref2.shape
    assert jnp.allclose(out2, ref2), "mismatch (unpadded, f32)"

    # Case 3: ho multiple of 8 (no scratch) + ragged last grid block (ncd=25, bn=3).
    x3 = jax.random.normal(k3, (1, 5, 10, 16, 12), dtype=jnp.float32)
    out3 = jax.block_until_ready(pad_max_pool3d(x3, 2, 2))
    ref3 = reference(x3, 2, 2)
    assert out3.shape == ref3.shape
    assert jnp.allclose(out3, ref3), "mismatch (ragged grid, f32)"

    # Case 4: bf16 inputs -> single-part compaction matmul.
    x4 = jax.random.normal(k4, (2, 4, 7, 9, 11), dtype=jnp.bfloat16)
    out4 = jax.block_until_ready(pad_max_pool3d(x4, 2, 2))
    ref4 = reference(x4, 2, 2).astype(jnp.bfloat16)
    assert out4.shape == ref4.shape and out4.dtype == jnp.bfloat16
    assert jnp.allclose(out4.astype(jnp.float32), ref4.astype(jnp.float32)), \
        "mismatch (bf16)"

    # Case 5: kernel_size != stride -> general (window-slab) path.
    x5 = jax.random.normal(k1, (1, 3, 7, 8, 9), dtype=jnp.float32)
    out5 = jax.block_until_ready(pad_max_pool3d(x5, 3, 2))
    ref5 = reference(x5, 3, 2)
    assert out5.shape == ref5.shape
    assert jnp.allclose(out5, ref5), "mismatch (k != s general path)"

    print("KERNEL_OK")
</pallas_src>

<mosaic_0001>
module attributes {stable_mosaic.version = 11 : i64} {
  func.func @_fused_pool_kernel(%arg0: i32, %arg1: memref<4x2x5x24xf32, #tpu.memory_space<vmem>>, %arg2: memref<4x5x6xf32, #tpu.memory_space<vmem>>, %arg3: memref<4x8x11xf32, #tpu.memory_space<vmem>>) attributes {dimension_semantics = [#tpu.dimension_semantics<parallel>], iteration_bounds = array<i64: 8>, scalar_prefetch = 0 : i64, scratch_operands = 1 : i64, tpu.core_type = #tpu.core_type<tc>, window_params = [{transform_indices = @transform_0, window_bounds = array<i64: 4, 2, 5, 24>}, {transform_indices = @transform_1, window_bounds = array<i64: 4, 5, 6>}]} {
    %c0 = arith.constant 0 : index
    %c0_0 = arith.constant 0 : index
    %c0_1 = arith.constant 0 : index
    %c0_2 = arith.constant 0 : index
    %0 = vector.load %arg1[%c0, %c0_0, %c0_1, %c0_2] : memref<4x2x5x24xf32, #tpu.memory_space<vmem>>, vector<4x1x5x24xf32>
    %1 = vector.shape_cast %0 : vector<4x1x5x24xf32> to vector<4x5x24xf32>
    %c0_3 = arith.constant 0 : index
    %c1 = arith.constant 1 : index
    %c0_4 = arith.constant 0 : index
    %c0_5 = arith.constant 0 : index
    %2 = vector.load %arg1[%c0_3, %c1, %c0_4, %c0_5] : memref<4x2x5x24xf32, #tpu.memory_space<vmem>>, vector<4x1x5x24xf32>
    %3 = vector.shape_cast %2 : vector<4x1x5x24xf32> to vector<4x5x24xf32>
    %4 = arith.maximumf %1, %3 : vector<4x5x24xf32>
    %5 = vector.extract_strided_slice %4 {offsets = [0, 0, 0], sizes = [4, 5, 12], strides = [1, 1, 1]} : vector<4x5x24xf32> to vector<4x5x12xf32>
    %6 = vector.extract_strided_slice %4 {offsets = [0, 0, 12], sizes = [4, 5, 12], strides = [1, 1, 1]} : vector<4x5x24xf32> to vector<4x5x12xf32>
    %7 = arith.maximumf %5, %6 : vector<4x5x12xf32>
    %8 = vector.extract_strided_slice %7 {offsets = [0, 0, 0], sizes = [4, 5, 11], strides = [1, 1, 1]} : vector<4x5x12xf32> to vector<4x5x11xf32>
    %9 = vector.extract_strided_slice %7 {offsets = [0, 0, 1], sizes = [4, 5, 11], strides = [1, 1, 1]} : vector<4x5x12xf32> to vector<4x5x11xf32>
    %10 = arith.maximumf %8, %9 : vector<4x5x11xf32>
    %c0_6 = arith.constant 0 : index
    %c0_7 = arith.constant 0 : index
    %c0_8 = arith.constant 0 : index
    %11 = vector.load %arg3[%c0_6, %c0_7, %c0_8] : memref<4x8x11xf32, #tpu.memory_space<vmem>>, vector<4x5x11xf32>
    tpu.vector_store %arg3[%c0_6, %c0_7, %c0_8], %10 {strides = array<i32>} : memref<4x8x11xf32, #tpu.memory_space<vmem>>, vector<4x5x11xf32>,
    %c0_9 = arith.constant 0 : index
    %c0_10 = arith.constant 0 : index
    %c0_11 = arith.constant 0 : index
    %12 = vector.load %arg3[%c0_9, %c0_10, %c0_11] : memref<4x8x11xf32, #tpu.memory_space<vmem>>, vector<4x8x11xf32>
    %13 = vector.shape_cast %12 : vector<4x8x11xf32> to vector<32x11xf32>
    %14 = arith.truncf %13 : vector<32x11xf32> to vector<32x11xbf16>
    %15 = arith.extf %14 : vector<32x11xbf16> to vector<32x11xf32>
    %16 = arith.subf %13, %15 : vector<32x11xf32>
    %17 = arith.truncf %16 : vector<32x11xf32> to vector<32x11xbf16>
    %18 = arith.extf %17 : vector<32x11xbf16> to vector<32x11xf32>
    %19 = arith.subf %16, %18 : vector<32x11xf32>
    %20 = arith.truncf %19 : vector<32x11xf32> to vector<32x11xbf16>
    %21 = tpu.concatenate %14, %17, %20 in 0 : vector<32x11xbf16>, vector<32x11xbf16>, vector<32x11xbf16> -> vector<96x11xbf16>
    %22 = tpu.iota {dimensions = array<i32: 0>} : vector<11x6xi32>
    %23 = tpu.iota {dimensions = array<i32: 1>} : vector<11x6xi32>
    %c2_i32 = arith.constant 2 : i32
    %24 = vector.broadcast %c2_i32 : i32 to vector<11x6xi32>
    %25 = arith.muli %23, %24 : vector<11x6xi32>
    %26 = arith.cmpi eq, %22, %25 : vector<11x6xi32>
    %27 = arith.extui %26 : vector<11x6xi1> to vector<11x6xi32>
    %28 = arith.sitofp %27 : vector<11x6xi32> to vector<11x6xf32>
    %29 = arith.truncf %28 : vector<11x6xf32> to vector<11x6xbf16>
    %cst = arith.constant dense<0.000000e+00> : vector<96x6xf32>
    %30 = tpu.matmul %21, %29, %cst {dimension_numbers = #tpu.dot_dimension_numbers<[1], [0], [0], [1], [0, 0, 1, 1], [], []>} : vector<96x11xbf16>, vector<11x6xbf16>, vector<96x6xf32> -> vector<96x6xf32>
    %31 = vector.extract_strided_slice %30 {offsets = [0, 0], sizes = [32, 6], strides = [1, 1]} : vector<96x6xf32> to vector<32x6xf32>
    %32 = vector.extract_strided_slice %30 {offsets = [32, 0], sizes = [32, 6], strides = [1, 1]} : vector<96x6xf32> to vector<32x6xf32>
    %33 = arith.addf %31, %32 : vector<32x6xf32>
    %34 = vector.extract_strided_slice %30 {offsets = [64, 0], sizes = [32, 6], strides = [1, 1]} : vector<96x6xf32> to vector<32x6xf32>
    %35 = arith.addf %33, %34 : vector<32x6xf32>
    %36 = vector.shape_cast %35 : vector<32x6xf32> to vector<4x8x6xf32>
    %37 = vector.extract_strided_slice %36 {offsets = [0, 0, 0], sizes = [4, 5, 6], strides = [1, 1, 1]} : vector<4x8x6xf32> to vector<4x5x6xf32>
    %c0_12 = arith.constant 0 : index
    %c0_13 = arith.constant 0 : index
    %c0_14 = arith.constant 0 : index
    %38 = vector.load %arg2[%c0_12, %c0_13, %c0_14] : memref<4x5x6xf32, #tpu.memory_space<vmem>>, vector<4x5x6xf32>
    tpu.vector_store %arg2[%c0_12, %c0_13, %c0_14], %37 {strides = array<i32>} : memref<4x5x6xf32, #tpu.memory_space<vmem>>, vector<4x5x6xf32>,
    return
  }
  func.func @transform_0(%arg0: i32) -> (i32, i32, i32, i32) {
    %c0_i32 = arith.constant 0 : i32
    %c0_i32_0 = arith.constant 0 : i32
    %c0_i32_1 = arith.constant 0 : i32
    %c0_i32_2 = arith.constant 0 : i32
    return %arg0, %c0_i32, %c0_i32_0, %c0_i32_1 : i32, i32, i32, i32
  }
  func.func @transform_1(%arg0: i32) -> (i32, i32, i32) {
    %c0_i32 = arith.constant 0 : i32
    %c0_i32_0 = arith.constant 0 : i32
    %c0_i32_1 = arith.constant 0 : i32
    return %arg0, %c0_i32, %c0_i32_0 : i32, i32, i32
  }
}

</mosaic_0001>

<llo_original>
// kernel: tpu_custom_call.1
$region0: #{tpu_custom_call.1}
  #allocation0 [shape = 'u32[]', space=smem, size = 0x4, offset = 0x4, fixed_abs, tag = 'smem constant byte address 0x4 - core index']
  #allocation1 [shape = 'u32[144,128]{1,0:T(1,128)}', space=vmem, size = 0x12000, scoped, tag = 'internal scratch']
  #allocation2 [shape = 'f32[4,8,11]{2,1,0:T(8,128)}', space=vmem, size = 0x4000, scoped, tag = 'scratch operand']
  %s0 = inlined_call_operand.vmem [shape: f32[32,2,5,24], index: 0, kind: input, shape index: {}]
  %s1 = inlined_call_operand.vmem [shape: f32[32,5,6], index: 1, kind: output, shape index: {}]
  %s2 = sld [smem:[#allocation0]]
  $region37: #{tpu_custom_call.1} parent=0
    _
  %s4 = ssub.s32 1, %s2
  %s5 = scalar_select 0, %s4, %s2
  loop: start=0, step=1, limit=10
  $region2: #{tpu_custom_call.1} parent=0 // loop_pre_header
    _
  $region3: #{tpu_custom_call.1} parent=0 // loop_header
    %s7 = sphi 0, %s11
    %p8 = scmp.ge.s32.totalorder %s7, 10
    %s17 = sphi 0, %s19
    %s20 = sphi 0, %s17
    %s21 = sphi 0, %s20
    %s37 = sphi 0, %s21
    %s43 = sphi 0, %s45
    %s46 = sphi 0, %s43
    %s47 = sphi 0, %s46
    %s63 = sphi 0, %s47
  $region4: #{tpu_custom_call.1} parent=0 // loop_header_branch
    %10 = sbr.rel (%p8) target = $region8
  $region5: #{tpu_custom_call.1} parent=0 // loop_body
    %s12 = ssub.s32 %s7, 1
    %s13 = ssub.s32 %s7, 2
    %s14 = sadd.s32 %s7, 1
    %s15 = ssub.s32 %s7, %s14
    %p16 = scmp.eq.s32.totalorder %s15, 0
    %s18 = sadd.s32 %s17, 1
    %s19 = scalar_select %p16, %s17, %s18
    %p22 = pneg %p16
    %p23 = scmp.eq.s32.totalorder %s7, 7
    %p24 = por %p22, %p23
    %p25 = scmp.ne.s32.totalorder %s17, %s20
    %p26 = scmp.eq.s32.totalorder %s7, 0
    %p27 = por %p25, %p26
    %p28 = scmp.ne.s32.totalorder %s17, %s20
    %p29 = scmp.eq.s32.totalorder %s12, 7
    %p30 = por %p28, %p29
    %p31 = scmp.ne.s32.totalorder %s20, %s21
    %p32 = scmp.eq.s32.totalorder %s12, 0
    %p33 = por %p31, %p32
    %p34 = scmp.ne.s32.totalorder %s20, %s21
    %p35 = scmp.eq.s32.totalorder %s13, 7
    %p36 = por %p34, %p35
    %p38 = scmp.ne.s32.totalorder %s21, %s37
    %p39 = scmp.eq.s32.totalorder %s13, 0
    %p40 = por %p38, %p39
    %s41 = ssub.s32 %s7, %s14
    %p42 = scmp.eq.s32.totalorder %s41, 0
    %s44 = sadd.s32 %s43, 1
    %s45 = scalar_select %p42, %s43, %s44
    %p48 = pneg %p42
    %p49 = scmp.eq.s32.totalorder %s7, 7
    %p50 = por %p48, %p49
    %p51 = scmp.ne.s32.totalorder %s43, %s46
    %p52 = scmp.eq.s32.totalorder %s7, 0
    %p53 = por %p51, %p52
    %p54 = scmp.ne.s32.totalorder %s43, %s46
    %p55 = scmp.eq.s32.totalorder %s12, 7
    %p56 = por %p54, %p55
    %p57 = scmp.ne.s32.totalorder %s46, %s47
    %p58 = scmp.eq.s32.totalorder %s12, 0
    %p59 = por %p57, %p58
    %p60 = scmp.ne.s32.totalorder %s46, %s47
    %p61 = scmp.eq.s32.totalorder %s13, 7
    %p62 = por %p60, %p61
    %p64 = scmp.ne.s32.totalorder %s47, %s63
    %p65 = scmp.eq.s32.totalorder %s13, 0
    %p66 = por %p64, %p65
    %p67 = scmp.le.s32.totalorder 1, %s7
    %p68 = scmp.lt.s32.totalorder %s7, 9
    %p69 = pnand %p67, %p68
    %p70 = pneg %p69
    // Predicated region
    $region9: #{tpu_custom_call.1} parent=5 // pred_check
      _
    $region10: #{tpu_custom_call.1} parent=5 // pred_check_branch
      %72 = sbr.rel (%p69) target = $region12
    $region11: #{tpu_custom_call.1} parent=5 // pred_region
      %s73 = ssub.s32 %s7, 1
    $region12: #{tpu_custom_call.1} parent=5 // pred_fallthru
      _
    %p74 = scmp.lt.s32.totalorder %s7, 8
    // Predicated region
    $region13: #{tpu_custom_call.1} parent=5 // pred_check
      %p75 = pneg %p74
    $region14: #{tpu_custom_call.1} parent=5 // pred_check_branch
      %77 = sbr.rel (%p75) target = $region16
    $region15: #{tpu_custom_call.1} parent=5 // pred_region
      // Predicated region
      $region17: #{tpu_custom_call.1} parent=15 // pred_check
        %p78 = pneg %p27
      $region18: #{tpu_custom_call.1} parent=15 // pred_check_branch
        %80 = sbr.rel (%p78) target = $region20
      $region19: #{tpu_custom_call.1} parent=15 // pred_region
        %s81 = smul.u32 4, %s7
        %p82 = scmp.lt.s32.totalorder %s81, 31
        %s83 = scalar_select %p82, %s81, 31
        %s84 = smul.addr %s83, 2
        %s85 = smul.addr %s84, 8
        %s86 = scalar_lea.vmem %s0, %s85
        %s87 = smul.u32 4, %s7
      $region20: #{tpu_custom_call.1} parent=15 // pred_fallthru
        _
    $region16: #{tpu_custom_call.1} parent=5 // pred_fallthru
      _
    %p88 = scmp.le.s32.totalorder 1, %s7
    %p89 = scmp.lt.s32.totalorder %s7, 9
    %p90 = pnand %p88, %p89
    %p91 = pneg %p90
    // Predicated region
    $region21: #{tpu_custom_call.1} parent=5 // pred_check
      _
    $region22: #{tpu_custom_call.1} parent=5 // pred_check_branch
      %93 = sbr.rel (%p90) target = $region24
    $region23: #{tpu_custom_call.1} parent=5 // pred_region
      %s94 = ssub.s32 %s7, 1
      %s95 = smul.u32 4, %s12
      %p96 = scmp.lt.s32.totalorder %s95, 31
      %s97 = scalar_select %p96, %s95, 31
      %s98 = smul.addr %s97, 2
      %s99 = smul.addr %s98, 8
      %s100 = scalar_lea.vmem %s0, %s99
      %p101 = pneg %p33
      %p102 = pneg %p30
      %p103 = pneg %p59
      %p104 = pneg %p56
      %s105 = smul.u32 4, %s12
      %p106 = scmp.lt.s32.totalorder %s105, 31
      %s107 = scalar_select %p106, %s105, 31
      %s108 = smul.addr %s107, 8
      %s109 = scalar_lea.vmem %s1, %s108
      %s110 = smul.u32 4, %s12
      %p111 = scmp.lt.s32.totalorder %s110, 31
      %s112 = scalar_select %p111, %s110, 31
      %s113 = smul.addr %s112, 2
      %s114 = smul.addr %s113, 8
      %s115 = scalar_lea.vmem %s0, %s114
      %s116 = smul.u32 4, %s12
      %s117 = smul.u32 4, %s12
      %p118 = scmp.lt.s32.totalorder %s117, 31
      %s119 = scalar_select %p118, %s117, 31
      %s120 = smul.addr %s119, 8
      %s121 = scalar_lea.vmem %s1, %s120
      %s122 = smul.u32 4, %s12
      %v124 = vld [vmem:[%s115] sm:$0x1f]
      %v125 = vld [vmem:[%s115 + $0x10] sm:$0x1f]
      %v126 = vld [vmem:[%s115 + $0x20] sm:$0x1f]
      %v127 = vld [vmem:[%s115 + $0x30] sm:$0x1f]
      %s128 = scalar_lea.vmem %s115, 8
      %v129 = vld [vmem:[%s128] sm:$0x1f]
      %v130 = vld [vmem:[%s128 + $0x10] sm:$0x1f]
      %v131 = vld [vmem:[%s128 + $0x20] sm:$0x1f]
      %v132 = vld [vmem:[%s128 + $0x30] sm:$0x1f]
      %v133 = vmax.f32 %v124, %v129
      %v134 = vmax.f32 %v125, %v130
      %v135 = vmax.f32 %v126, %v131
      %v136 = vmax.f32 %v127, %v132
      %141 = vrot.lane.b32.xlu0 %v133, 116
      %v142 = vpop.permute.xlu0 %141
      %143 = vrot.lane.b32.xlu0 %v134, 116
      %v144 = vpop.permute.xlu0 %143
      %145 = vrot.lane.b32.xlu0 %v135, 116
      %v146 = vpop.permute.xlu0 %145
      %147 = vrot.lane.b32.xlu0 %v136, 116
      %v148 = vpop.permute.xlu0 %147
      %v153 = vmax.f32 %v133, %v142
      %v154 = vmax.f32 %v134, %v144
      %v155 = vmax.f32 %v135, %v146
      %v156 = vmax.f32 %v136, %v148
      %161 = vrot.lane.b32.xlu0 %v153, 127
      %v162 = vpop.permute.xlu0 %161
      %163 = vrot.lane.b32.xlu0 %v154, 127
      %v164 = vpop.permute.xlu0 %163
      %165 = vrot.lane.b32.xlu0 %v155, 127
      %v166 = vpop.permute.xlu0 %165
      %167 = vrot.lane.b32.xlu0 %v156, 127
      %v168 = vpop.permute.xlu0 %167
      %v173 = vmax.f32 %v153, %v162
      %v174 = vmax.f32 %v154, %v164
      %v175 = vmax.f32 %v155, %v166
      %v176 = vmax.f32 %v156, %v168
      %vm177 = vcmask 86016
      %178 = vst.msk [vmem:[#allocation2] sm:$0x1f] %vm177, %v173
      %179 = vst.msk [vmem:[#allocation2 + $0x8] sm:$0x1f] %vm177, %v174
      %180 = vst.msk [vmem:[#allocation2 + $0x10] sm:$0x1f] %vm177, %v175
      %181 = vst.msk [vmem:[#allocation2 + $0x18] sm:$0x1f] %vm177, %v176
      %v182 = vld [vmem:[#allocation2] sm:$0xff]
      %v183 = vld [vmem:[#allocation2 + $0x8] sm:$0xff]
      %v184 = vld [vmem:[#allocation2 + $0x10] sm:$0xff]
      %v185 = vld [vmem:[#allocation2 + $0x18] sm:$0xff]
      %v186 = vpack.c.bf16 %v183, %v182
      %v187 = vpack.c.bf16 %v185, %v184
      %v188 = vunpack.c.l.bf16 %v186
      %v189 = vunpack.c.h.bf16 %v186
      %v190 = vunpack.c.l.bf16 %v187
      %v191 = vunpack.c.h.bf16 %v187
      %v192 = vsub.f32 %v182, %v188
      %v193 = vsub.f32 %v183, %v189
      %v194 = vsub.f32 %v184, %v190
      %v195 = vsub.f32 %v185, %v191
      %v196 = vpack.c.bf16 %v193, %v192
      %v197 = vpack.c.bf16 %v195, %v194
      %v198 = vunpack.c.l.bf16 %v196
      %v199 = vunpack.c.h.bf16 %v196
      %v200 = vunpack.c.l.bf16 %v197
      %v201 = vunpack.c.h.bf16 %v197
      %v202 = vsub.f32 %v192, %v198
      %v203 = vsub.f32 %v193, %v199
      %v204 = vsub.f32 %v194, %v200
      %v205 = vsub.f32 %v195, %v201
      %v206 = vpack.c.bf16 %v203, %v202
      %v207 = vpack.c.bf16 %v205, %v204
      %v208 = vlaneseq
      %v209 = vshrl.u32 %v208, 7
      %v210 = vadd.s32 %v209, 8
      %v211 = vlaneseq
      %v212 = vand.u32 %v211, 127
      %v213 = vmul.u32 %v212, 2
      %vm214 = vcmp.eq.s32.totalorder %v209, %v213
      %vm215 = vcmp.eq.s32.totalorder %v210, %v213
      %v216 = vsel %vm214, 1, 0
      %v217 = vsel %vm215, 1, 0
      %v218 = vcvt.s32.f32 %v216
      %v219 = vcvt.s32.f32 %v217
      %v220 = vpack.c.bf16 %v219, %v218
      %vm221 = vcmask 89088
      %v223 = vsel %vm221, %v186, 0
      %v226 = vsel %vm221, %v187, 0
      %v229 = vsel %vm221, %v196, 0
      %v232 = vsel %vm221, %v197, 0
      %v235 = vsel %vm221, %v206, 0
      %v238 = vsel %vm221, %v207, 0
      %vm240 = vcmask 1044480
      %vm241 = vcmask 1045504
      %v242 = vsel %vm240, 4294967295, 65535
      %v243 = vsel %vm241, %v242, 0
      %v245 = vand.u32 %v220, %v243
      %247 = vmatprep.subr.bf16.mxu0 0
      %248 = vmatpush1.bf16.msra.mxu0 %v245
      %249 = vmatprep.subr.bf16.mxu0 0
      %250 = vmatpush1.bf16.msra.mxu0 0
      %251 = vmatprep.subr.bf16.mxu0 0
      %252 = vmatpush1.bf16.msra.mxu0 0
      %253 = vmatprep.subr.bf16.mxu0 0
      %254 = vmatpush1.bf16.msra.mxu0 0
      %255 = vmatprep.subr.bf16.mxu0 0
      %256 = vmatpush1.bf16.msra.mxu0 0
      %257 = vmatprep.subr.bf16.mxu0 0
      %258 = vmatpush1.bf16.msra.mxu0 0
      %259 = vmatprep.subr.bf16.mxu0 0
      %260 = vmatpush1.bf16.msra.mxu0 0
      %261 = vmatprep.subr.bf16.mxu0 0
      %262 = vmatpush1.bf16.msra.mxu0 0
      %263 = vmatprep.subr.bf16.mxu0 0
      %264 = vmatpush1.bf16.msra.mxu0 0
      %265 = vmatprep.subr.bf16.mxu0 0
      %266 = vmatpush1.bf16.msra.mxu0 0
      %267 = vmatprep.subr.bf16.mxu0 0
      %268 = vmatpush1.bf16.msra.mxu0 0
      %269 = vmatprep.subr.bf16.mxu0 0
      %270 = vmatpush1.bf16.msra.mxu0 0
      %271 = vmatprep.subr.bf16.mxu0 0
      %272 = vmatpush1.bf16.msra.mxu0 0
      %273 = vmatprep.subr.bf16.mxu0 0
      %274 = vmatpush1.bf16.msra.mxu0 0
      %275 = vmatprep.subr.bf16.mxu0 0
      %276 = vmatpush1.bf16.msra.mxu0 0
      %277 = vmatprep.subr.bf16.mxu0 0
      %278 = vmatpush1.bf16.msra.mxu0 0
      %279 = vmatprep.mubr.bf16.mxu0 0
      %280 = vmatmul.mubr.bf16.gmra.mrb[0].mxu0 %v223
      %v281 = vpop.f32.mrb[0].mxu0
      %v282 = vadd.f32 0.0, %v281
      %v283 = vpop.f32.mrb[0].mxu0
      %v284 = vpop.f32.mrb[0].mxu0
      %v285 = vadd.f32 0.0, %v284
      %v286 = vpop.f32.mrb[0].mxu0
      %287 = vmatprep.mubr.bf16.mxu0 0
      %288 = vmatmul.mubr.bf16.gmra.mrb[0].mxu0 %v226
      %v289 = vpop.f32.mrb[0].mxu0
      %v290 = vadd.f32 0.0, %v289
      %v291 = vpop.f32.mrb[0].mxu0
      %v292 = vpop.f32.mrb[0].mxu0
      %v293 = vadd.f32 0.0, %v292
      %v294 = vpop.f32.mrb[0].mxu0
      %295 = vmatprep.mubr.bf16.mxu0 0
      %296 = vmatmul.mubr.bf16.gmra.mrb[0].mxu0 %v229
      %v297 = vpop.f32.mrb[0].mxu0
      %v298 = vadd.f32 0.0, %v297
      %v299 = vpop.f32.mrb[0].mxu0
      %v300 = vpop.f32.mrb[0].mxu0
      %v301 = vadd.f32 0.0, %v300
      %v302 = vpop.f32.mrb[0].mxu0
      %303 = vmatprep.mubr.bf16.mxu0 0
      %304 = vmatmul.mubr.bf16.gmra.mrb[0].mxu0 %v232
      %v305 = vpop.f32.mrb[0].mxu0
      %v306 = vadd.f32 0.0, %v305
      %v307 = vpop.f32.mrb[0].mxu0
      %v308 = vpop.f32.mrb[0].mxu0
      %v309 = vadd.f32 0.0, %v308
      %v310 = vpop.f32.mrb[0].mxu0
      %311 = vmatprep.mubr.bf16.mxu0 0
      %312 = vmatmul.mubr.bf16.gmra.mrb[0].mxu0 %v235
      %v313 = vpop.f32.mrb[0].mxu0
      %v314 = vadd.f32 0.0, %v313
      %v315 = vpop.f32.mrb[0].mxu0
      %v316 = vpop.f32.mrb[0].mxu0
      %v317 = vadd.f32 0.0, %v316
      %v318 = vpop.f32.mrb[0].mxu0
      %319 = vmatprep.mubr.bf16.mxu0 0
      %320 = vmatmul.mubr.bf16.gmra.mrb[0].mxu0 %v238
      %v321 = vpop.f32.mrb[0].mxu0
      %v322 = vadd.f32 0.0, %v321
      %v323 = vpop.f32.mrb[0].mxu0
      %v324 = vpop.f32.mrb[0].mxu0
      %v325 = vadd.f32 0.0, %v324
      %v326 = vpop.f32.mrb[0].mxu0
      %327 = vdwg.mxu0
      %v328 = vadd.f32 %v282, %v298
      %v329 = vadd.f32 %v285, %v301
      %v330 = vadd.f32 %v290, %v306
      %v331 = vadd.f32 %v293, %v309
      %v332 = vadd.f32 %v328, %v314
      %v333 = vadd.f32 %v329, %v317
      %v334 = vadd.f32 %v330, %v322
      %v335 = vadd.f32 %v331, %v325
      %vm336 = vcmask 45056
      %337 = vst.msk [vmem:[%s121] sm:$0x1f] %vm336, %v332
      %338 = vst.msk [vmem:[%s121 + $0x8] sm:$0x1f] %vm336, %v333
      %339 = vst.msk [vmem:[%s121 + $0x10] sm:$0x1f] %vm336, %v334
      %340 = vst.msk [vmem:[%s121 + $0x18] sm:$0x1f] %vm336, %v335
      %s341 = smul.u32 4, %s12
      %p342 = scmp.lt.s32.totalorder %s341, 31
      %s343 = scalar_select %p342, %s341, 31
      %s344 = smul.addr %s343, 8
      %s345 = scalar_lea.vmem %s1, %s344
      // Predicated region
      $region25: #{tpu_custom_call.1} parent=23 // pred_check
        %p346 = pneg %p56
      $region26: #{tpu_custom_call.1} parent=23 // pred_check_branch
        %348 = sbr.rel (%p346) target = $region28
      $region27: #{tpu_custom_call.1} parent=23 // pred_region
        %s349 = smul.u32 4, %s12
      $region28: #{tpu_custom_call.1} parent=23 // pred_fallthru
        _
    $region24: #{tpu_custom_call.1} parent=5 // pred_fallthru
      _
    %p350 = scmp.le.s32.totalorder 2, %s7
    // Predicated region
    $region29: #{tpu_custom_call.1} parent=5 // pred_check
      %p351 = pneg %p350
    $region30: #{tpu_custom_call.1} parent=5 // pred_check_branch
      %353 = sbr.rel (%p351) target = $region32
    $region31: #{tpu_custom_call.1} parent=5 // pred_region
      %s354 = ssub.s32 %s7, 2
      // Predicated region
      $region33: #{tpu_custom_call.1} parent=31 // pred_check
        %p355 = pneg %p62
      $region34: #{tpu_custom_call.1} parent=31 // pred_check_branch
        %357 = sbr.rel (%p355) target = $region36
      $region35: #{tpu_custom_call.1} parent=31 // pred_region
        %s358 = smul.u32 4, %s13
        %p359 = scmp.lt.s32.totalorder %s358, 31
        %s360 = scalar_select %p359, %s358, 31
        %s361 = smul.addr %s360, 8
        %s362 = scalar_lea.vmem %s1, %s361
      $region36: #{tpu_custom_call.1} parent=31 // pred_fallthru
        _
    $region32: #{tpu_custom_call.1} parent=5 // pred_fallthru
      _
  $region6: #{tpu_custom_call.1} parent=0 // loop_footer
    %s11 = sadd.s32 1, %s7
  $region7: #{tpu_custom_call.1} parent=0 // loop_footer_branch
    %6 = sbr.rel target = $region3
  $region8: #{tpu_custom_call.1} parent=0 // loop_exit
    _

</llo_original>
